<compile_context>
chip_gen: v7x
topology: tpu7x:2x2x1
jax: 0.10.0
libtpu: 0.0.40
codegen_flags: <defaults>
</compile_context>

<pallas_src>
import numpy as np

import jax
import jax.numpy as jnp
from jax.experimental import pallas as pl
from jax.experimental.pallas import tpu as pltpu

LANE = 128
SUB = 8


def _round_up(x, m):
    return (x + m - 1) // m * m


def make_textcnn_kernel(seq_len, split_len, k_max, U_p, Vp, F, Fp, kernel_sizes):
    """Per-text fused gather + conv + relu + mask + max-pool + fc kernel (one grid step = one text)."""

    def kernel(ids_ref, bd_ref, wtap_ref, bconv_ref, fcw_ref, fcb_ref, o_ref):
        # ---- fused embedding gather + PyTorch raw reshape: one-hot(ids) @ block-diag(emb) ----
        ids = ids_ref[0]                                               # (U_p, split) int32
        lane_v = jax.lax.broadcasted_iota(jnp.int32, (U_p, Vp), 1)
        oh = jnp.concatenate(
            [jnp.where(ids[:, j:j + 1] == lane_v, 1.0, 0.0).astype(jnp.bfloat16)
             for j in range(split_len)],
            axis=1)                                                    # (U_p, split*Vp) bf16, lane-aligned concat
        xrows = jnp.dot(oh, bd_ref[...],
                        preferred_element_type=jnp.float32)            # (U_p, Wp) f32 conv-input rows

        # ---- all convs / all taps: sum of k_max MXU dots over W-packed rows (no per-tap pad) ----
        s = jnp.zeros((seq_len, Fp), jnp.float32)
        for dt in range(k_max):
            s = s + jnp.dot(xrows[dt:dt + seq_len, :].astype(jnp.bfloat16),
                            wtap_ref[dt],
                            preferred_element_type=jnp.float32)        # (seq, Fp) f32
        s = s + bconv_ref[...]                                         # conv bias (padded chans = 0)

        # ---- relu + in-kernel validity mask (iota compares run on slack VALU slots) ----
        t_idx = jax.lax.broadcasted_iota(jnp.int32, (seq_len, Fp), 0)
        f_idx = jax.lax.broadcasted_iota(jnp.int32, (seq_len, Fp), 1)
        valid = None
        for c, k in enumerate(kernel_sizes):
            cond = (f_idx >= c * F) & (f_idx < (c + 1) * F) & (t_idx <= seq_len - k)
            valid = cond if valid is None else (valid | cond)
        a = jnp.where(valid, jnp.maximum(s, 0.0), 0.0)                 # relu >= 0 -> mask-to-0 is max-safe

        # ---- max-pool over time, then the final Linear (lane-dense 128-wide store) ----
        pooled = jnp.max(a, axis=0, keepdims=True)                     # (1, Fp) f32
        out = jnp.dot(pooled.astype(jnp.bfloat16), fcw_ref[...],
                      preferred_element_type=jnp.float32) + fcb_ref[...]
        o_ref[0] = out                                                 # (1, Cp) f32

    return kernel


def textcnn_forward(texts, emb_table, conv_ws, conv_bs, fc_w, fc_b, kernel_sizes):
    """texts: (N, split_len, seq_len) int32 token ids; returns (N, num_classes) float32."""
    N, split_len, seq_len = texts.shape
    vocab, E = emb_table.shape
    W = split_len * E
    F = conv_ws[0].shape[0]
    F_total = len(kernel_sizes) * F
    C = fc_w.shape[0]
    k_max = max(kernel_sizes)
    assert all(1 <= k <= seq_len for k in kernel_sizes)   # stride=1, k <= seq_len assumed

    Vp = _round_up(vocab, LANE)        # vocab padded to a lane tile (per token slot)
    Wp = _round_up(W, LANE)            # conv-input row width padded ONCE (no per-tap padding)
    Fp = _round_up(F_total, LANE)      # channel axis padded -> lane-dense post-matmul work
    Cp = _round_up(C, LANE)            # class axis padded   -> lane-dense output store
    U = seq_len + k_max - 1            # conv-input rows needed per text (incl. overhang rows)
    U_p = _round_up(U, SUB)

    # ---- glue: int32 token-id plumbing only (the embedding gather itself happens in-kernel) ----
    # PyTorch's raw reshape means conv-input row u holds tokens [u*split, (u+1)*split) of the
    # row-major (split, seq) flattened token grid; overhang / pad rows use token id 0 and only
    # ever feed masked time steps or zero-weight taps.
    tok = texts.reshape(N, split_len * seq_len).astype(jnp.int32)
    tok = jnp.concatenate(
        [tok, jnp.zeros((N, U_p * split_len - split_len * seq_len), jnp.int32)], axis=1)
    ids = tok.reshape(N, U_p, split_len)                               # (N, U_p, split) int32

    # ---- parameter prep (one-time in real use) ----
    # Gather table: `split` copies of the embedding packed at stride E (deduped from k_max*split).
    bd = jnp.zeros((split_len * Vp, Wp), jnp.float32)
    for j in range(split_len):
        bd = bd.at[j * Vp:j * Vp + vocab, j * E:(j + 1) * E].set(emb_table)
    bd = bd.astype(jnp.bfloat16)

    # Per-tap conv weights, all convs concatenated on the 128-padded channel axis; taps of shorter
    # kernels, padded rows and padded channels stay exactly 0 (keeps mask / max / fc correct).
    wtap = jnp.zeros((k_max, Wp, Fp), jnp.float32)
    for c, (cw, k) in enumerate(zip(conv_ws, kernel_sizes)):
        w_kwf = jnp.transpose(cw[:, 0, :, :], (1, 2, 0))               # (k, W, F)
        wtap = wtap.at[:k, :W, c * F:(c + 1) * F].set(w_kwf)
    wtap = wtap.astype(jnp.bfloat16)

    bconv = jnp.zeros((1, Fp), jnp.float32)
    bconv = bconv.at[0, :F_total].set(jnp.concatenate([cb.reshape(F) for cb in conv_bs]))

    fcw = jnp.zeros((Fp, Cp), jnp.float32).at[:F_total, :C].set(fc_w.T).astype(jnp.bfloat16)
    fcb = jnp.zeros((1, Cp), jnp.float32).at[:, :C].set(fc_b.reshape(1, C))

    kernel = make_textcnn_kernel(seq_len, split_len, k_max, U_p, Vp, F, Fp, tuple(kernel_sizes))

    flops = 2 * N * (U_p * split_len * Vp * Wp + seq_len * k_max * Wp * Fp + Fp * Cp)
    bytes_accessed = (ids.size * 4 + bd.size * 2 + wtap.size * 2 + bconv.size * 4
                      + fcw.size * 2 + fcb.size * 4 + N * Cp * 4)

    out_p = pl.pallas_call(
        kernel,
        out_shape=jax.ShapeDtypeStruct((N, 1, Cp), jnp.float32),
        grid=(N,),
        in_specs=[
            pl.BlockSpec((1, U_p, split_len), lambda n: (n, 0, 0)),    # per-text token ids (pipelined)
            pl.BlockSpec((split_len * Vp, Wp), lambda n: (0, 0)),      # gather table (VMEM-resident)
            pl.BlockSpec((k_max, Wp, Fp), lambda n: (0, 0, 0)),        # conv weights (resident)
            pl.BlockSpec((1, Fp), lambda n: (0, 0)),                   # conv bias
            pl.BlockSpec((Fp, Cp), lambda n: (0, 0)),                  # fc weight (resident)
            pl.BlockSpec((1, Cp), lambda n: (0, 0)),                   # fc bias
        ],
        out_specs=pl.BlockSpec((1, 1, Cp), lambda n: (n, 0, 0)),
        compiler_params=pltpu.CompilerParams(
            dimension_semantics=("parallel",)),                        # v7x: texts sharded on 2 TCs
        cost_estimate=pl.CostEstimate(flops=flops, transcendentals=0,
                                      bytes_accessed=bytes_accessed),
    )(ids, bd, wtap, bconv, fcw, fcb)
    return out_p[:, 0, :C]


def reference_forward(texts, emb_table, conv_ws, conv_bs, fc_w, fc_b, kernel_sizes):
    """Pure-JAX f32 reference mirroring the PyTorch forward exactly."""
    N, split_len, seq_len = texts.shape
    E = emb_table.shape[1]
    W = split_len * E
    pools = []
    for n in range(N):
        emb = emb_table[texts[n]]                      # (split, seq, E)
        x = emb.reshape(1, seq_len, W)[0]              # raw row-major reshape (== torch.reshape)
        feats = []
        for cw, cb, k in zip(conv_ws, conv_bs, kernel_sizes):
            L = seq_len - k + 1
            patches = jnp.stack([x[t:t + k, :] for t in range(L)])     # (L, k, W)
            conv = jnp.einsum('lkw,fkw->lf', patches, cw[:, 0]) + cb   # (L, F)
            feats.append(jnp.max(jnp.maximum(conv, 0.0), axis=0))
        pools.append(jnp.concatenate(feats))
    pool = jnp.stack(pools)                            # (N, F_total)
    return pool @ fc_w.T + fc_b


if __name__ == "__main__":
    # Small, module-consistent config.
    vocab_size = 50
    num_classes = 4
    num_kernels = 8
    kernel_sizes = (2, 3)
    emb_size = 16
    split_len = 5
    seq_len = 8
    padding_index = 0
    N = 2                               # number of texts in text_list

    key = jax.random.PRNGKey(0)
    keys = jax.random.split(key, 8)

    # Deterministic synthetic parameters (shapes match the nn.Module __init__).
    emb_table = jax.random.normal(keys[0], (vocab_size, emb_size), jnp.float32) * 0.1
    emb_table = emb_table.at[padding_index].set(0.0)          # padding_idx row is zero

    conv_ws, conv_bs = [], []
    for i, k in enumerate(kernel_sizes):
        conv_ws.append(jax.random.normal(
            keys[1 + i], (num_kernels, 1, k, emb_size * split_len), jnp.float32) * 0.05)
        conv_bs.append(jax.random.normal(keys[3 + i], (num_kernels,), jnp.float32) * 0.05)

    fc_w = jax.random.normal(
        keys[5], (num_classes, num_kernels * len(kernel_sizes)), jnp.float32) * 0.1
    fc_b = jax.random.normal(keys[6], (num_classes,), jnp.float32) * 0.1

    # text_list: N texts, each (split_len, seq_len) of token ids.
    texts = jax.random.randint(keys[7], (N, split_len, seq_len), 0, vocab_size, jnp.int32)

    out = textcnn_forward(texts, emb_table, conv_ws, conv_bs, fc_w, fc_b, kernel_sizes)
    out = jax.block_until_ready(out)

    ref = reference_forward(texts, emb_table, conv_ws, conv_bs, fc_w, fc_b, kernel_sizes)
    assert out.shape == (N, num_classes), out.shape
    # bf16 MXU operands (f32 accumulation) -> relative error ~1e-3; tolerance set accordingly.
    assert jnp.allclose(out, ref, atol=2e-2, rtol=2e-2), (out, ref)

    print("KERNEL_OK")
</pallas_src>

<mosaic_0001>
module attributes {stable_mosaic.version = 11 : i64} {
  func.func @kernel(%arg0: i32, %arg1: memref<1x16x5xi32, #tpu.memory_space<vmem>>, %arg2: memref<640x128xbf16, #tpu.memory_space<vmem>>, %arg3: memref<3x128x128xbf16, #tpu.memory_space<vmem>>, %arg4: memref<1x128xf32, #tpu.memory_space<vmem>>, %arg5: memref<128x128xbf16, #tpu.memory_space<vmem>>, %arg6: memref<1x128xf32, #tpu.memory_space<vmem>>, %arg7: memref<1x1x128xf32, #tpu.memory_space<vmem>>) attributes {dimension_semantics = [#tpu.dimension_semantics<parallel>], iteration_bounds = array<i64: 2>, scalar_prefetch = 0 : i64, scratch_operands = 0 : i64, tpu.core_type = #tpu.core_type<tc>, window_params = [{transform_indices = @transform_0, window_bounds = array<i64: 1, 16, 5>}, {pipeline_mode = #tpu.pipeline_mode<synchronous>, transform_indices = @transform_1, window_bounds = array<i64: 640, 128>}, {pipeline_mode = #tpu.pipeline_mode<synchronous>, transform_indices = @transform_2, window_bounds = array<i64: 3, 128, 128>}, {pipeline_mode = #tpu.pipeline_mode<synchronous>, transform_indices = @transform_3, window_bounds = array<i64: 1, 128>}, {pipeline_mode = #tpu.pipeline_mode<synchronous>, transform_indices = @transform_4, window_bounds = array<i64: 128, 128>}, {pipeline_mode = #tpu.pipeline_mode<synchronous>, transform_indices = @transform_5, window_bounds = array<i64: 1, 128>}, {transform_indices = @transform_6, window_bounds = array<i64: 1, 1, 128>}]} {
    %c0 = arith.constant 0 : index
    %c0_0 = arith.constant 0 : index
    %c0_1 = arith.constant 0 : index
    %0 = vector.load %arg1[%c0, %c0_0, %c0_1] : memref<1x16x5xi32, #tpu.memory_space<vmem>>, vector<1x16x5xi32>
    %1 = vector.shape_cast %0 : vector<1x16x5xi32> to vector<16x5xi32>
    %2 = tpu.iota {dimensions = array<i32: 1>} : vector<16x128xi32>
    %3 = vector.extract_strided_slice %1 {offsets = [0, 0], sizes = [16, 1], strides = [1, 1]} : vector<16x5xi32> to vector<16x1xi32>
    %4 = vector.broadcast %3 : vector<16x1xi32> to vector<16x128xi32>
    %5 = arith.cmpi eq, %4, %2 : vector<16x128xi32>
    %cst = arith.constant 1.000000e+00 : f32
    %cst_2 = arith.constant 0.000000e+00 : f32
    %6 = vector.broadcast %cst : f32 to vector<16x128xf32>
    %7 = vector.broadcast %cst_2 : f32 to vector<16x128xf32>
    %8 = arith.select %5, %6, %7 : vector<16x128xi1>, vector<16x128xf32>
    %9 = arith.truncf %8 : vector<16x128xf32> to vector<16x128xbf16>
    %10 = vector.extract_strided_slice %1 {offsets = [0, 1], sizes = [16, 1], strides = [1, 1]} : vector<16x5xi32> to vector<16x1xi32>
    %11 = vector.broadcast %10 : vector<16x1xi32> to vector<16x128xi32>
    %12 = arith.cmpi eq, %11, %2 : vector<16x128xi32>
    %cst_3 = arith.constant 1.000000e+00 : f32
    %cst_4 = arith.constant 0.000000e+00 : f32
    %13 = vector.broadcast %cst_3 : f32 to vector<16x128xf32>
    %14 = vector.broadcast %cst_4 : f32 to vector<16x128xf32>
    %15 = arith.select %12, %13, %14 : vector<16x128xi1>, vector<16x128xf32>
    %16 = arith.truncf %15 : vector<16x128xf32> to vector<16x128xbf16>
    %17 = vector.extract_strided_slice %1 {offsets = [0, 2], sizes = [16, 1], strides = [1, 1]} : vector<16x5xi32> to vector<16x1xi32>
    %18 = vector.broadcast %17 : vector<16x1xi32> to vector<16x128xi32>
    %19 = arith.cmpi eq, %18, %2 : vector<16x128xi32>
    %cst_5 = arith.constant 1.000000e+00 : f32
    %cst_6 = arith.constant 0.000000e+00 : f32
    %20 = vector.broadcast %cst_5 : f32 to vector<16x128xf32>
    %21 = vector.broadcast %cst_6 : f32 to vector<16x128xf32>
    %22 = arith.select %19, %20, %21 : vector<16x128xi1>, vector<16x128xf32>
    %23 = arith.truncf %22 : vector<16x128xf32> to vector<16x128xbf16>
    %24 = vector.extract_strided_slice %1 {offsets = [0, 3], sizes = [16, 1], strides = [1, 1]} : vector<16x5xi32> to vector<16x1xi32>
    %25 = vector.broadcast %24 : vector<16x1xi32> to vector<16x128xi32>
    %26 = arith.cmpi eq, %25, %2 : vector<16x128xi32>
    %cst_7 = arith.constant 1.000000e+00 : f32
    %cst_8 = arith.constant 0.000000e+00 : f32
    %27 = vector.broadcast %cst_7 : f32 to vector<16x128xf32>
    %28 = vector.broadcast %cst_8 : f32 to vector<16x128xf32>
    %29 = arith.select %26, %27, %28 : vector<16x128xi1>, vector<16x128xf32>
    %30 = arith.truncf %29 : vector<16x128xf32> to vector<16x128xbf16>
    %31 = vector.extract_strided_slice %1 {offsets = [0, 4], sizes = [16, 1], strides = [1, 1]} : vector<16x5xi32> to vector<16x1xi32>
    %32 = vector.broadcast %31 : vector<16x1xi32> to vector<16x128xi32>
    %33 = arith.cmpi eq, %32, %2 : vector<16x128xi32>
    %cst_9 = arith.constant 1.000000e+00 : f32
    %cst_10 = arith.constant 0.000000e+00 : f32
    %34 = vector.broadcast %cst_9 : f32 to vector<16x128xf32>
    %35 = vector.broadcast %cst_10 : f32 to vector<16x128xf32>
    %36 = arith.select %33, %34, %35 : vector<16x128xi1>, vector<16x128xf32>
    %37 = arith.truncf %36 : vector<16x128xf32> to vector<16x128xbf16>
    %38 = tpu.concatenate %9, %16, %23, %30, %37 in 1 : vector<16x128xbf16>, vector<16x128xbf16>, vector<16x128xbf16>, vector<16x128xbf16>, vector<16x128xbf16> -> vector<16x640xbf16>
    %c0_11 = arith.constant 0 : index
    %c0_12 = arith.constant 0 : index
    %39 = vector.load %arg2[%c0_11, %c0_12] : memref<640x128xbf16, #tpu.memory_space<vmem>>, vector<640x128xbf16>
    %cst_13 = arith.constant dense<0.000000e+00> : vector<16x128xf32>
    %40 = tpu.matmul %38, %39, %cst_13 {dimension_numbers = #tpu.dot_dimension_numbers<[1], [0], [0], [1], [0, 0, 1, 1], [], []>} : vector<16x640xbf16>, vector<640x128xbf16>, vector<16x128xf32> -> vector<16x128xf32>
    %cst_14 = arith.constant 0.000000e+00 : f32
    %41 = vector.broadcast %cst_14 : f32 to vector<8x128xf32>
    %42 = vector.extract_strided_slice %40 {offsets = [0, 0], sizes = [8, 128], strides = [1, 1]} : vector<16x128xf32> to vector<8x128xf32>
    %43 = arith.truncf %42 : vector<8x128xf32> to vector<8x128xbf16>
    %c0_15 = arith.constant 0 : index
    %c0_16 = arith.constant 0 : index
    %c0_17 = arith.constant 0 : index
    %44 = vector.load %arg3[%c0_15, %c0_16, %c0_17] : memref<3x128x128xbf16, #tpu.memory_space<vmem>>, vector<1x128x128xbf16>
    %45 = vector.shape_cast %44 : vector<1x128x128xbf16> to vector<128x128xbf16>
    %cst_18 = arith.constant dense<0.000000e+00> : vector<8x128xf32>
    %46 = tpu.matmul %43, %45, %cst_18 {dimension_numbers = #tpu.dot_dimension_numbers<[1], [0], [0], [1], [0, 0, 1, 1], [], []>} : vector<8x128xbf16>, vector<128x128xbf16>, vector<8x128xf32> -> vector<8x128xf32>
    %47 = arith.addf %41, %46 : vector<8x128xf32>
    %48 = vector.extract_strided_slice %40 {offsets = [1, 0], sizes = [8, 128], strides = [1, 1]} : vector<16x128xf32> to vector<8x128xf32>
    %49 = arith.truncf %48 : vector<8x128xf32> to vector<8x128xbf16>
    %c1 = arith.constant 1 : index
    %c0_19 = arith.constant 0 : index
    %c0_20 = arith.constant 0 : index
    %50 = vector.load %arg3[%c1, %c0_19, %c0_20] : memref<3x128x128xbf16, #tpu.memory_space<vmem>>, vector<1x128x128xbf16>
    %51 = vector.shape_cast %50 : vector<1x128x128xbf16> to vector<128x128xbf16>
    %cst_21 = arith.constant dense<0.000000e+00> : vector<8x128xf32>
    %52 = tpu.matmul %49, %51, %cst_21 {dimension_numbers = #tpu.dot_dimension_numbers<[1], [0], [0], [1], [0, 0, 1, 1], [], []>} : vector<8x128xbf16>, vector<128x128xbf16>, vector<8x128xf32> -> vector<8x128xf32>
    %53 = arith.addf %47, %52 : vector<8x128xf32>
    %54 = vector.extract_strided_slice %40 {offsets = [2, 0], sizes = [8, 128], strides = [1, 1]} : vector<16x128xf32> to vector<8x128xf32>
    %55 = arith.truncf %54 : vector<8x128xf32> to vector<8x128xbf16>
    %c2 = arith.constant 2 : index
    %c0_22 = arith.constant 0 : index
    %c0_23 = arith.constant 0 : index
    %56 = vector.load %arg3[%c2, %c0_22, %c0_23] : memref<3x128x128xbf16, #tpu.memory_space<vmem>>, vector<1x128x128xbf16>
    %57 = vector.shape_cast %56 : vector<1x128x128xbf16> to vector<128x128xbf16>
    %cst_24 = arith.constant dense<0.000000e+00> : vector<8x128xf32>
    %58 = tpu.matmul %55, %57, %cst_24 {dimension_numbers = #tpu.dot_dimension_numbers<[1], [0], [0], [1], [0, 0, 1, 1], [], []>} : vector<8x128xbf16>, vector<128x128xbf16>, vector<8x128xf32> -> vector<8x128xf32>
    %59 = arith.addf %53, %58 : vector<8x128xf32>
    %c0_25 = arith.constant 0 : index
    %c0_26 = arith.constant 0 : index
    %60 = vector.load %arg4[%c0_25, %c0_26] : memref<1x128xf32, #tpu.memory_space<vmem>>, vector<1x128xf32>
    %61 = vector.broadcast %60 : vector<1x128xf32> to vector<8x128xf32>
    %62 = arith.addf %59, %61 : vector<8x128xf32>
    %63 = tpu.iota {dimensions = array<i32: 0>} : vector<8x128xi32>
    %64 = tpu.iota {dimensions = array<i32: 1>} : vector<8x128xi32>
    %c0_i32 = arith.constant 0 : i32
    %65 = vector.broadcast %c0_i32 : i32 to vector<8x128xi32>
    %66 = arith.cmpi sge, %64, %65 : vector<8x128xi32>
    %c8_i32 = arith.constant 8 : i32
    %67 = vector.broadcast %c8_i32 : i32 to vector<8x128xi32>
    %68 = arith.cmpi slt, %64, %67 : vector<8x128xi32>
    %69 = arith.andi %66, %68 : vector<8x128xi1>
    %c6_i32 = arith.constant 6 : i32
    %70 = vector.broadcast %c6_i32 : i32 to vector<8x128xi32>
    %71 = arith.cmpi sle, %63, %70 : vector<8x128xi32>
    %72 = arith.andi %69, %71 : vector<8x128xi1>
    %c8_i32_27 = arith.constant 8 : i32
    %73 = vector.broadcast %c8_i32_27 : i32 to vector<8x128xi32>
    %74 = arith.cmpi sge, %64, %73 : vector<8x128xi32>
    %c16_i32 = arith.constant 16 : i32
    %75 = vector.broadcast %c16_i32 : i32 to vector<8x128xi32>
    %76 = arith.cmpi slt, %64, %75 : vector<8x128xi32>
    %77 = arith.andi %74, %76 : vector<8x128xi1>
    %c5_i32 = arith.constant 5 : i32
    %78 = vector.broadcast %c5_i32 : i32 to vector<8x128xi32>
    %79 = arith.cmpi sle, %63, %78 : vector<8x128xi32>
    %80 = arith.andi %77, %79 : vector<8x128xi1>
    %81 = arith.ori %72, %80 : vector<8x128xi1>
    %cst_28 = arith.constant 0.000000e+00 : f32
    %82 = vector.broadcast %cst_28 : f32 to vector<8x128xf32>
    %83 = arith.maximumf %62, %82 : vector<8x128xf32>
    %cst_29 = arith.constant 0.000000e+00 : f32
    %84 = vector.broadcast %cst_29 : f32 to vector<8x128xf32>
    %85 = arith.select %81, %83, %84 : vector<8x128xi1>, vector<8x128xf32>
    %cst_30 = arith.constant dense<0xFF800000> : vector<128xf32>
    %86 = vector.multi_reduction <maximumf>, %85, %cst_30 [0] : vector<8x128xf32> to vector<128xf32>
    %87 = vector.shape_cast %86 : vector<128xf32> to vector<1x128xf32>
    %88 = arith.truncf %87 : vector<1x128xf32> to vector<1x128xbf16>
    %c0_31 = arith.constant 0 : index
    %c0_32 = arith.constant 0 : index
    %89 = vector.load %arg5[%c0_31, %c0_32] : memref<128x128xbf16, #tpu.memory_space<vmem>>, vector<128x128xbf16>
    %cst_33 = arith.constant dense<0.000000e+00> : vector<1x128xf32>
    %90 = tpu.matmul %88, %89, %cst_33 {dimension_numbers = #tpu.dot_dimension_numbers<[1], [0], [0], [1], [0, 0, 1, 1], [], []>} : vector<1x128xbf16>, vector<128x128xbf16>, vector<1x128xf32> -> vector<1x128xf32>
    %c0_34 = arith.constant 0 : index
    %c0_35 = arith.constant 0 : index
    %91 = vector.load %arg6[%c0_34, %c0_35] : memref<1x128xf32, #tpu.memory_space<vmem>>, vector<1x128xf32>
    %92 = arith.addf %90, %91 : vector<1x128xf32>
    %c0_36 = arith.constant 0 : index
    %c0_37 = arith.constant 0 : index
    %c0_38 = arith.constant 0 : index
    %93 = vector.load %arg7[%c0_36, %c0_37, %c0_38] : memref<1x1x128xf32, #tpu.memory_space<vmem>>, vector<1x1x128xf32>
    %94 = vector.shape_cast %93 : vector<1x1x128xf32> to vector<1x128xf32>
    %95 = vector.shape_cast %92 : vector<1x128xf32> to vector<1x1x128xf32>
    tpu.vector_store %arg7[%c0_36, %c0_37, %c0_38], %95 {strides = array<i32>} : memref<1x1x128xf32, #tpu.memory_space<vmem>>, vector<1x1x128xf32>,
    return
  }
  func.func @transform_0(%arg0: i32) -> (i32, i32, i32) {
    %c0_i32 = arith.constant 0 : i32
    %c0_i32_0 = arith.constant 0 : i32
    %c0_i32_1 = arith.constant 0 : i32
    return %arg0, %c0_i32, %c0_i32_0 : i32, i32, i32
  }
  func.func @transform_1(%arg0: i32) -> (i32, i32) {
    %c0_i32 = arith.constant 0 : i32
    %c0_i32_0 = arith.constant 0 : i32
    %c0_i32_1 = arith.constant 0 : i32
    return %c0_i32, %c0_i32_0 : i32, i32
  }
  func.func @transform_2(%arg0: i32) -> (i32, i32, i32) {
    %c0_i32 = arith.constant 0 : i32
    %c0_i32_0 = arith.constant 0 : i32
    %c0_i32_1 = arith.constant 0 : i32
    %c0_i32_2 = arith.constant 0 : i32
    return %c0_i32, %c0_i32_0, %c0_i32_1 : i32, i32, i32
  }
  func.func @transform_3(%arg0: i32) -> (i32, i32) {
    %c0_i32 = arith.constant 0 : i32
    %c0_i32_0 = arith.constant 0 : i32
    %c0_i32_1 = arith.constant 0 : i32
    return %c0_i32, %c0_i32_0 : i32, i32
  }
  func.func @transform_4(%arg0: i32) -> (i32, i32) {
    %c0_i32 = arith.constant 0 : i32
    %c0_i32_0 = arith.constant 0 : i32
    %c0_i32_1 = arith.constant 0 : i32
    return %c0_i32, %c0_i32_0 : i32, i32
  }
  func.func @transform_5(%arg0: i32) -> (i32, i32) {
    %c0_i32 = arith.constant 0 : i32
    %c0_i32_0 = arith.constant 0 : i32
    %c0_i32_1 = arith.constant 0 : i32
    return %c0_i32, %c0_i32_0 : i32, i32
  }
  func.func @transform_6(%arg0: i32) -> (i32, i32, i32) {
    %c0_i32 = arith.constant 0 : i32
    %c0_i32_0 = arith.constant 0 : i32
    %c0_i32_1 = arith.constant 0 : i32
    return %arg0, %c0_i32, %c0_i32_0 : i32, i32, i32
  }
}

</mosaic_0001>

<llo_original>
// kernel: tpu_custom_call.1
$region0: #{tpu_custom_call.1}
  #allocation0 [shape = 'u32[]', space=smem, size = 0x4, offset = 0x4, fixed_abs, tag = 'smem constant byte address 0x4 - core index']
  #allocation1 [shape = 'u32[144,128]{1,0:T(1,128)}', space=vmem, size = 0x12000, scoped, tag = 'internal scratch']
  %s0 = inlined_call_operand.vmem [shape: s32[2,16,5], index: 0, kind: input, shape index: {}]
  %s1 = inlined_call_operand.hbm [shape: bf16[640,128], index: 1, kind: input, shape index: {}]
  %s2 = inlined_call_operand.hbm [shape: bf16[3,128,128], index: 2, kind: input, shape index: {}]
  %s3 = inlined_call_operand.vmem [shape: f32[1,128], index: 3, kind: input, shape index: {}]
  %s4 = inlined_call_operand.hbm [shape: bf16[128,128], index: 4, kind: input, shape index: {}]
  %s5 = inlined_call_operand.vmem [shape: f32[1,128], index: 5, kind: input, shape index: {}]
  %s6 = inlined_call_operand.hbm [shape: f32[2,1,128], index: 6, kind: output, shape index: {}]
  %s7 = sld [smem:[#allocation0]]
  $region69: #{tpu_custom_call.1} parent=0
    _
  %s9 = ssub.s32 1, %s7
  %s10 = scalar_select 0, %s9, %s7
  $region1: #{tpu_custom_call.1} parent=0
    #allocation2 [shape = 'u8[163840]{0}', space=vmem, size = 0x28000, scoped, tag = 'input window, operand 1, single buffered']
    #allocation3 [shape = 's32[2]{0}', space=sflag, size = 0x8, scoped, tag = 'scoped memory for tpu_custom_call.1']
    #allocation4 [shape = 's32[2]{0}', space=sflag, size = 0x8, scoped, tag = 'scoped memory for tpu_custom_call.1']
    #allocation5 [shape = 'u8[98304]{0}', space=vmem, size = 0x18000, scoped, tag = 'input window, operand 2, single buffered']
    #allocation6 [shape = 's32[1]{0}', space=sflag, size = 0x4, scoped, tag = 'scoped memory for tpu_custom_call.1']
    #allocation7 [shape = 'u8[32768]{0}', space=vmem, size = 0x8000, scoped, tag = 'input window, operand 4, single buffered']
    #allocation8 [shape = 'u8[1024]{0}', space=vmem, size = 0x400, scoped, tag = 'output window, operand 0']
    %11 = vsyncpa [#allocation3], 0
    %12 = vsyncpa [#allocation6], 0
    %13 = vsyncpa [#allocation4], 0
    %s14 = scalar_lea.sflag [#allocation4], 1
    %15 = vsyncpa %s14, 0
    loop: start=0, step=1, limit=4
    $region2: #{tpu_custom_call.1} parent=1 // loop_pre_header
      _
    $region3: #{tpu_custom_call.1} parent=1 // loop_header
      %s17 = sphi 0, %s21
      %p18 = scmp.ge.s32.totalorder %s17, 4
      %s27 = sphi 0, %s29
      %s30 = sphi 0, %s27
      %s31 = sphi 0, %s30
      %s47 = sphi 0, %s31
      %s51 = sphi 0, %s51
      %s53 = sphi 0, %s51
      %s54 = sphi 0, %s53
      %s68 = sphi 0, %s54
      %s72 = sphi 0, %s72
      %s74 = sphi 0, %s72
      %s75 = sphi 0, %s74
      %s89 = sphi 0, %s75
      %s93 = sphi 0, %s93
      %s95 = sphi 0, %s93
      %s96 = sphi 0, %s95
      %s110 = sphi 0, %s96
      %s114 = sphi 0, %s114
      %s116 = sphi 0, %s114
      %s117 = sphi 0, %s116
      %s131 = sphi 0, %s117
      %s135 = sphi 0, %s135
      %s137 = sphi 0, %s135
      %s138 = sphi 0, %s137
      %s152 = sphi 0, %s138
      %s158 = sphi 0, %s160
      %s161 = sphi 0, %s158
      %s162 = sphi 0, %s161
      %s178 = sphi 0, %s162
    $region4: #{tpu_custom_call.1} parent=1 // loop_header_branch
      %20 = sbr.rel (%p18) target = $region8
    $region5: #{tpu_custom_call.1} parent=1 // loop_body
      %s22 = ssub.s32 %s17, 1
      %s23 = ssub.s32 %s17, 2
      %s24 = sadd.s32 %s17, 1
      %s25 = ssub.s32 %s17, %s24
      %p26 = scmp.eq.s32.totalorder %s25, 0
      %s28 = sadd.s32 %s27, 1
      %s29 = scalar_select %p26, %s27, %s28
      %p32 = pneg %p26
      %p33 = scmp.eq.s32.totalorder %s17, 1
      %p34 = por %p32, %p33
      %p35 = scmp.ne.s32.totalorder %s27, %s30
      %p36 = scmp.eq.s32.totalorder %s17, 0
      %p37 = por %p35, %p36
      %p38 = scmp.ne.s32.totalorder %s27, %s30
      %p39 = scmp.eq.s32.totalorder %s22, 1
      %p40 = por %p38, %p39
      %p41 = scmp.ne.s32.totalorder %s30, %s31
      %p42 = scmp.eq.s32.totalorder %s22, 0
      %p43 = por %p41, %p42
      %p44 = scmp.ne.s32.totalorder %s30, %s31
      %p45 = scmp.eq.s32.totalorder %s23, 1
      %p46 = por %p44, %p45
      %p48 = scmp.ne.s32.totalorder %s31, %s47
      %p49 = scmp.eq.s32.totalorder %s23, 0
      %p50 = por %p48, %p49
      %s52 = sadd.s32 %s51, 1
      %p55 = scmp.eq.s32.totalorder %s17, 1
      %p56 = scmp.ne.s32.totalorder %s51, %s53
      %p57 = scmp.eq.s32.totalorder %s17, 0
      %p58 = por %p56, %p57
      %p59 = scmp.ne.s32.totalorder %s51, %s53
      %p60 = scmp.eq.s32.totalorder %s22, 1
      %p61 = por %p59, %p60
      %p62 = scmp.ne.s32.totalorder %s53, %s54
      %p63 = scmp.eq.s32.totalorder %s22, 0
      %p64 = por %p62, %p63
      %p65 = scmp.ne.s32.totalorder %s53, %s54
      %p66 = scmp.eq.s32.totalorder %s23, 1
      %p67 = por %p65, %p66
      %p69 = scmp.ne.s32.totalorder %s54, %s68
      %p70 = scmp.eq.s32.totalorder %s23, 0
      %p71 = por %p69, %p70
      %s73 = sadd.s32 %s72, 1
      %p76 = scmp.eq.s32.totalorder %s17, 1
      %p77 = scmp.ne.s32.totalorder %s72, %s74
      %p78 = scmp.eq.s32.totalorder %s17, 0
      %p79 = por %p77, %p78
      %p80 = scmp.ne.s32.totalorder %s72, %s74
      %p81 = scmp.eq.s32.totalorder %s22, 1
      %p82 = por %p80, %p81
      %p83 = scmp.ne.s32.totalorder %s74, %s75
      %p84 = scmp.eq.s32.totalorder %s22, 0
      %p85 = por %p83, %p84
      %p86 = scmp.ne.s32.totalorder %s74, %s75
      %p87 = scmp.eq.s32.totalorder %s23, 1
      %p88 = por %p86, %p87
      %p90 = scmp.ne.s32.totalorder %s75, %s89
      %p91 = scmp.eq.s32.totalorder %s23, 0
      %p92 = por %p90, %p91
      %s94 = sadd.s32 %s93, 1
      %p97 = scmp.eq.s32.totalorder %s17, 1
      %p98 = scmp.ne.s32.totalorder %s93, %s95
      %p99 = scmp.eq.s32.totalorder %s17, 0
      %p100 = por %p98, %p99
      %p101 = scmp.ne.s32.totalorder %s93, %s95
      %p102 = scmp.eq.s32.totalorder %s22, 1
      %p103 = por %p101, %p102
      %p104 = scmp.ne.s32.totalorder %s95, %s96
      %p105 = scmp.eq.s32.totalorder %s22, 0
      %p106 = por %p104, %p105
      %p107 = scmp.ne.s32.totalorder %s95, %s96
      %p108 = scmp.eq.s32.totalorder %s23, 1
      %p109 = por %p107, %p108
      %p111 = scmp.ne.s32.totalorder %s96, %s110
      %p112 = scmp.eq.s32.totalorder %s23, 0
      %p113 = por %p111, %p112
      %s115 = sadd.s32 %s114, 1
      %p118 = scmp.eq.s32.totalorder %s17, 1
      %p119 = scmp.ne.s32.totalorder %s114, %s116
      %p120 = scmp.eq.s32.totalorder %s17, 0
      %p121 = por %p119, %p120
      %p122 = scmp.ne.s32.totalorder %s114, %s116
      %p123 = scmp.eq.s32.totalorder %s22, 1
      %p124 = por %p122, %p123
      %p125 = scmp.ne.s32.totalorder %s116, %s117
      %p126 = scmp.eq.s32.totalorder %s22, 0
      %p127 = por %p125, %p126
      %p128 = scmp.ne.s32.totalorder %s116, %s117
      %p129 = scmp.eq.s32.totalorder %s23, 1
      %p130 = por %p128, %p129
      %p132 = scmp.ne.s32.totalorder %s117, %s131
      %p133 = scmp.eq.s32.totalorder %s23, 0
      %p134 = por %p132, %p133
      %s136 = sadd.s32 %s135, 1
      %p139 = scmp.eq.s32.totalorder %s17, 1
      %p140 = scmp.ne.s32.totalorder %s135, %s137
      %p141 = scmp.eq.s32.totalorder %s17, 0
      %p142 = por %p140, %p141
      %p143 = scmp.ne.s32.totalorder %s135, %s137
      %p144 = scmp.eq.s32.totalorder %s22, 1
      %p145 = por %p143, %p144
      %p146 = scmp.ne.s32.totalorder %s137, %s138
      %p147 = scmp.eq.s32.totalorder %s22, 0
      %p148 = por %p146, %p147
      %p149 = scmp.ne.s32.totalorder %s137, %s138
      %p150 = scmp.eq.s32.totalorder %s23, 1
      %p151 = por %p149, %p150
      %p153 = scmp.ne.s32.totalorder %s138, %s152
      %p154 = scmp.eq.s32.totalorder %s23, 0
      %p155 = por %p153, %p154
      %s156 = ssub.s32 %s17, %s24
      %p157 = scmp.eq.s32.totalorder %s156, 0
      %s159 = sadd.s32 %s158, 1
      %s160 = scalar_select %p157, %s158, %s159
      %p163 = pneg %p157
      %p164 = scmp.eq.s32.totalorder %s17, 1
      %p165 = por %p163, %p164
      %p166 = scmp.ne.s32.totalorder %s158, %s161
      %p167 = scmp.eq.s32.totalorder %s17, 0
      %p168 = por %p166, %p167
      %p169 = scmp.ne.s32.totalorder %s158, %s161
      %p170 = scmp.eq.s32.totalorder %s22, 1
      %p171 = por %p169, %p170
      %p172 = scmp.ne.s32.totalorder %s161, %s162
      %p173 = scmp.eq.s32.totalorder %s22, 0
      %p174 = por %p172, %p173
      %p175 = scmp.ne.s32.totalorder %s161, %s162
      %p176 = scmp.eq.s32.totalorder %s23, 1
      %p177 = por %p175, %p176
      %p179 = scmp.ne.s32.totalorder %s162, %s178
      %p180 = scmp.eq.s32.totalorder %s23, 0
      %p181 = por %p179, %p180
      %p182 = scmp.le.s32.totalorder 1, %s17
      %p183 = scmp.lt.s32.totalorder %s17, 3
      %p184 = pnand %p182, %p183
      %p185 = pneg %p184
      // Predicated region
      $region9: #{tpu_custom_call.1} parent=5 // pred_check
        _
      $region10: #{tpu_custom_call.1} parent=5 // pred_check_branch
        %187 = sbr.rel (%p184) target = $region12
      $region11: #{tpu_custom_call.1} parent=5 // pred_region
        %s188 = ssub.s32 %s17, 1
        // Predicated region
        $region13: #{tpu_custom_call.1} parent=11 // pred_check
          %p189 = pneg %p64
        $region14: #{tpu_custom_call.1} parent=11 // pred_check_branch
          %191 = sbr.rel (%p189) target = $region16
        $region15: #{tpu_custom_call.1} parent=11 // pred_region
          %s193 = ssub.s32 5120, 5120
          %194 = vsyncadd [#allocation3], %s193
          %s195 = sshll.u32 [#allocation2], 4
          %s196 = int_to_ptr.vmem [resolvable:$true] %s195
          %201 = dma.hbm_to_vmem [thread:$0]  %s1, 5120, %s196, [#allocation3], 64, 64, 4
        $region16: #{tpu_custom_call.1} parent=11 // pred_fallthru
          _
        // Predicated region
        $region17: #{tpu_custom_call.1} parent=11 // pred_check
          %p202 = pneg %p85
        $region18: #{tpu_custom_call.1} parent=11 // pred_check_branch
          %204 = sbr.rel (%p202) target = $region20
        $region19: #{tpu_custom_call.1} parent=11 // pred_region
          %s206 = ssub.s32 3072, 3072
          %207 = vsyncadd [#allocation6], %s206
          %s208 = sshll.u32 [#allocation5], 4
          %s209 = int_to_ptr.vmem [resolvable:$true] %s208
          %214 = dma.hbm_to_vmem [thread:$0]  %s2, 3072, %s209, [#allocation6], 64, 64, 4
        $region20: #{tpu_custom_call.1} parent=11 // pred_fallthru
          _
        // Predicated region
        $region21: #{tpu_custom_call.1} parent=11 // pred_check
          %p215 = pneg %p106
        $region22: #{tpu_custom_call.1} parent=11 // pred_check_branch
          %217 = sbr.rel (%p215) target = $region24
        $region23: #{tpu_custom_call.1} parent=11 // pred_region
          _
        $region24: #{tpu_custom_call.1} parent=11 // pred_fallthru
          _
        // Predicated region
        $region25: #{tpu_custom_call.1} parent=11 // pred_check
          %p218 = pneg %p127
        $region26: #{tpu_custom_call.1} parent=11 // pred_check_branch
          %220 = sbr.rel (%p218) target = $region28
        $region27: #{tpu_custom_call.1} parent=11 // pred_region
          %s222 = ssub.s32 1024, 1024
          %223 = vsyncadd [#allocation6], %s222
          %s224 = sshll.u32 [#allocation7], 4
          %s225 = int_to_ptr.vmem [resolvable:$true] %s224
          %230 = dma.hbm_to_vmem [thread:$0]  %s4, 1024, %s225, [#allocation6], 64, 64, 4
        $region28: #{tpu_custom_call.1} parent=11 // pred_fallthru
          _
        // Predicated region
        $region29: #{tpu_custom_call.1} parent=11 // pred_check
          %p231 = pneg %p148
        $region30: #{tpu_custom_call.1} parent=11 // pred_check_branch
          %233 = sbr.rel (%p231) target = $region32
        $region31: #{tpu_custom_call.1} parent=11 // pred_region
          _
        $region32: #{tpu_custom_call.1} parent=11 // pred_fallthru
          _
      $region12: #{tpu_custom_call.1} parent=5 // pred_fallthru
        _
      %p234 = scmp.lt.s32.totalorder %s17, 2
      // Predicated region
      $region33: #{tpu_custom_call.1} parent=5 // pred_check
        %p235 = pneg %p234
      $region34: #{tpu_custom_call.1} parent=5 // pred_check_branch
        %237 = sbr.rel (%p235) target = $region36
      $region35: #{tpu_custom_call.1} parent=5 // pred_region
        // Predicated region
        $region37: #{tpu_custom_call.1} parent=35 // pred_check
          %p238 = pneg %p37
        $region38: #{tpu_custom_call.1} parent=35 // pred_check_branch
          %240 = sbr.rel (%p238) target = $region40
        $region39: #{tpu_custom_call.1} parent=35 // pred_region
          %p241 = scmp.lt.s32.totalorder %s17, 1
          %s242 = scalar_select %p241, %s17, 1
          %s243 = smul.addr %s242, 2
          %s244 = smul.addr %s243, 8
          %s245 = scalar_lea.vmem %s0, %s244
        $region40: #{tpu_custom_call.1} parent=35 // pred_fallthru
          _
      $region36: #{tpu_custom_call.1} parent=5 // pred_fallthru
        _
      %p246 = scmp.le.s32.totalorder 1, %s17
      %p247 = scmp.lt.s32.totalorder %s17, 3
      %p248 = pnand %p246, %p247
      %p249 = pneg %p248
      // Predicated region
      $region41: #{tpu_custom_call.1} parent=5 // pred_check
        _
      $region42: #{tpu_custom_call.1} parent=5 // pred_check_branch
        %251 = sbr.rel (%p248) target = $region44
      $region43: #{tpu_custom_call.1} parent=5 // pred_region
        %s252 = ssub.s32 %s17, 1
        // Predicated region
        $region45: #{tpu_custom_call.1} parent=43 // pred_check
          %p253 = pneg %p64
        $region46: #{tpu_custom_call.1} parent=43 // pred_check_branch
          %255 = sbr.rel (%p253) target = $region48
        $region47: #{tpu_custom_call.1} parent=43 // pred_region
          %256 = dma.done [#allocation3], 5120
        $region48: #{tpu_custom_call.1} parent=43 // pred_fallthru
          _
        // Predicated region
        $region49: #{tpu_custom_call.1} parent=43 // pred_check
          %p257 = pneg %p85
        $region50: #{tpu_custom_call.1} parent=43 // pred_check_branch
          %259 = sbr.rel (%p257) target = $region52
        $region51: #{tpu_custom_call.1} parent=43 // pred_region
          %260 = dma.done [#allocation6], 3072
        $region52: #{tpu_custom_call.1} parent=43 // pred_fallthru
          _
        // Predicated region
        $region53: #{tpu_custom_call.1} parent=43 // pred_check
          %p261 = pneg %p127
        $region54: #{tpu_custom_call.1} parent=43 // pred_check_branch
          %263 = sbr.rel (%p261) target = $region56
        $region55: #{tpu_custom_call.1} parent=43 // pred_region
          %264 = dma.done [#allocation6], 1024
        $region56: #{tpu_custom_call.1} parent=43 // pred_fallthru
          _
        %p265 = scmp.lt.s32.totalorder %s22, 1
        %s266 = scalar_select %p265, %s22, 1
        %s267 = smul.addr %s266, 2
        %s268 = smul.addr %s267, 8
        %s269 = scalar_lea.vmem %s0, %s268
        %p270 = pneg %p43
        %p271 = pneg %p40
        %p272 = pneg %p64
        %p273 = pneg %p61
        %p274 = pneg %p85
        %p275 = pneg %p82
        %p276 = pneg %p106
        %p277 = pneg %p103
        %p278 = pneg %p127
        %p279 = pneg %p124
        %p280 = pneg %p148
        %p281 = pneg %p145
        %p282 = pneg %p174
        %p283 = pneg %p171
        %s284 = sand.u32 %s161, 1
        %s285 = scalar_lea.sflag [#allocation4], %s284
        %s286 = sand.u32 %s161, 1
        %s287 = scalar_lea.vmem [#allocation8], %s286
        %p288 = scmp.lt.s32.totalorder %s22, 1
        %s289 = scalar_select %p288, %s22, 1
        %s290 = smul.addr %s289, 2
        %s291 = smul.addr %s290, 8
        %s292 = scalar_lea.vmem %s0, %s291
        %v294 = vld [vmem:[%s292] sm:$0xff]
        %v295 = vld [vmem:[%s292 + $0x8] sm:$0xff]
        %v296 = vlaneseq
        %v297 = vand.u32 %v296, 127
        %298 = vset.pattern.permute.xlu0 0
        %299 = vperm.xlu0 %298, %v294
        %v300 = vpop.permute.xlu0 %299
        %301 = vset.pattern.permute.xlu0 0
        %302 = vperm.xlu0 %301, %v295
        %v303 = vpop.permute.xlu0 %302
        %vm304 = vcmp.eq.s32.totalorder %v300, %v297
        %vm305 = vcmp.eq.s32.totalorder %v303, %v297
        %v306 = vsel %vm304, 1.0, 0.0
        %v307 = vsel %vm305, 1.0, 0.0
        %v308 = vpack.c.bf16 %v307, %v306
        %309 = vset.pattern.permute.xlu0 1
        %310 = vperm.xlu0 %309, %v294
        %v311 = vpop.permute.xlu0 %310
        %312 = vset.pattern.permute.xlu0 1
        %313 = vperm.xlu0 %312, %v295
        %v314 = vpop.permute.xlu0 %313
        %vm315 = vcmp.eq.s32.totalorder %v311, %v297
        %vm316 = vcmp.eq.s32.totalorder %v314, %v297
        %v317 = vsel %vm315, 1.0, 0.0
        %v318 = vsel %vm316, 1.0, 0.0
        %v319 = vpack.c.bf16 %v318, %v317
        %320 = vset.pattern.permute.xlu0 2
        %321 = vperm.xlu0 %320, %v294
        %v322 = vpop.permute.xlu0 %321
        %323 = vset.pattern.permute.xlu0 2
        %324 = vperm.xlu0 %323, %v295
        %v325 = vpop.permute.xlu0 %324
        %vm326 = vcmp.eq.s32.totalorder %v322, %v297
        %vm327 = vcmp.eq.s32.totalorder %v325, %v297
        %v328 = vsel %vm326, 1.0, 0.0
        %v329 = vsel %vm327, 1.0, 0.0
        %v330 = vpack.c.bf16 %v329, %v328
        %331 = vset.pattern.permute.xlu0 3
        %332 = vperm.xlu0 %331, %v294
        %v333 = vpop.permute.xlu0 %332
        %334 = vset.pattern.permute.xlu0 3
        %335 = vperm.xlu0 %334, %v295
        %v336 = vpop.permute.xlu0 %335
        %vm337 = vcmp.eq.s32.totalorder %v333, %v297
        %vm338 = vcmp.eq.s32.totalorder %v336, %v297
        %v339 = vsel %vm337, 1.0, 0.0
        %v340 = vsel %vm338, 1.0, 0.0
        %v341 = vpack.c.bf16 %v340, %v339
        %342 = vset.pattern.permute.xlu0 4
        %343 = vperm.xlu0 %342, %v294
        %v344 = vpop.permute.xlu0 %343
        %345 = vset.pattern.permute.xlu0 4
        %346 = vperm.xlu0 %345, %v295
        %v347 = vpop.permute.xlu0 %346
        %vm348 = vcmp.eq.s32.totalorder %v344, %v297
        %vm349 = vcmp.eq.s32.totalorder %v347, %v297
        %v350 = vsel %vm348, 1.0, 0.0
        %v351 = vsel %vm349, 1.0, 0.0
        %v352 = vpack.c.bf16 %v351, %v350
        %v353 = vld [vmem:[#allocation2] sm:$0xf]
        %v354 = vld [vmem:[#allocation2 + $0x4] sm:$0xf]
        %v355 = vld [vmem:[#allocation2 + $0x8] sm:$0xf]
        %v356 = vld [vmem:[#allocation2 + $0xc] sm:$0xf]
        %v357 = vld [vmem:[#allocation2 + $0x10] sm:$0xf]
        %v358 = vld [vmem:[#allocation2 + $0x14] sm:$0xf]
        %v359 = vld [vmem:[#allocation2 + $0x18] sm:$0xf]
        %v360 = vld [vmem:[#allocation2 + $0x1c] sm:$0xf]
        %v361 = vld [vmem:[#allocation2 + $0x20] sm:$0xf]
        %v362 = vld [vmem:[#allocation2 + $0x24] sm:$0xf]
        %v363 = vld [vmem:[#allocation2 + $0x28] sm:$0xf]
        %v364 = vld [vmem:[#allocation2 + $0x2c] sm:$0xf]
        %v365 = vld [vmem:[#allocation2 + $0x30] sm:$0xf]
        %v366 = vld [vmem:[#allocation2 + $0x34] sm:$0xf]
        %v367 = vld [vmem:[#allocation2 + $0x38] sm:$0xf]
        %v368 = vld [vmem:[#allocation2 + $0x3c] sm:$0xf]
        %v369 = vld [vmem:[#allocation2 + $0x40] sm:$0xf]
        %v370 = vld [vmem:[#allocation2 + $0x44] sm:$0xf]
        %v371 = vld [vmem:[#allocation2 + $0x48] sm:$0xf]
        %v372 = vld [vmem:[#allocation2 + $0x4c] sm:$0xf]
        %v373 = vld [vmem:[#allocation2 + $0x50] sm:$0xf]
        %v374 = vld [vmem:[#allocation2 + $0x54] sm:$0xf]
        %v375 = vld [vmem:[#allocation2 + $0x58] sm:$0xf]
        %v376 = vld [vmem:[#allocation2 + $0x5c] sm:$0xf]
        %v377 = vld [vmem:[#allocation2 + $0x60] sm:$0xf]
        %v378 = vld [vmem:[#allocation2 + $0x64] sm:$0xf]
        %v379 = vld [vmem:[#allocation2 + $0x68] sm:$0xf]
        %v380 = vld [vmem:[#allocation2 + $0x6c] sm:$0xf]
        %v381 = vld [vmem:[#allocation2 + $0x70] sm:$0xf]
        %v382 = vld [vmem:[#allocation2 + $0x74] sm:$0xf]
        %v383 = vld [vmem:[#allocation2 + $0x78] sm:$0xf]
        %v384 = vld [vmem:[#allocation2 + $0x7c] sm:$0xf]
        %v385 = vld [vmem:[#allocation2 + $0x80] sm:$0xf]
        %v386 = vld [vmem:[#allocation2 + $0x84] sm:$0xf]
        %v387 = vld [vmem:[#allocation2 + $0x88] sm:$0xf]
        %v388 = vld [vmem:[#allocation2 + $0x8c] sm:$0xf]
        %v389 = vld [vmem:[#allocation2 + $0x90] sm:$0xf]
        %v390 = vld [vmem:[#allocation2 + $0x94] sm:$0xf]
        %v391 = vld [vmem:[#allocation2 + $0x98] sm:$0xf]
        %v392 = vld [vmem:[#allocation2 + $0x9c] sm:$0xf]
        %v393 = vld [vmem:[#allocation2 + $0xa0] sm:$0xf]
        %v394 = vld [vmem:[#allocation2 + $0xa4] sm:$0xf]
        %v395 = vld [vmem:[#allocation2 + $0xa8] sm:$0xf]
        %v396 = vld [vmem:[#allocation2 + $0xac] sm:$0xf]
        %v397 = vld [vmem:[#allocation2 + $0xb0] sm:$0xf]
        %v398 = vld [vmem:[#allocation2 + $0xb4] sm:$0xf]
        %v399 = vld [vmem:[#allocation2 + $0xb8] sm:$0xf]
        %v400 = vld [vmem:[#allocation2 + $0xbc] sm:$0xf]
        %v401 = vld [vmem:[#allocation2 + $0xc0] sm:$0xf]
        %v402 = vld [vmem:[#allocation2 + $0xc4] sm:$0xf]
        %v403 = vld [vmem:[#allocation2 + $0xc8] sm:$0xf]
        %v404 = vld [vmem:[#allocation2 + $0xcc] sm:$0xf]
        %v405 = vld [vmem:[#allocation2 + $0xd0] sm:$0xf]
        %v406 = vld [vmem:[#allocation2 + $0xd4] sm:$0xf]
        %v407 = vld [vmem:[#allocation2 + $0xd8] sm:$0xf]
        %v408 = vld [vmem:[#allocation2 + $0xdc] sm:$0xf]
        %v409 = vld [vmem:[#allocation2 + $0xe0] sm:$0xf]
        %v410 = vld [vmem:[#allocation2 + $0xe4] sm:$0xf]
        %v411 = vld [vmem:[#allocation2 + $0xe8] sm:$0xf]
        %v412 = vld [vmem:[#allocation2 + $0xec] sm:$0xf]
        %v413 = vld [vmem:[#allocation2 + $0xf0] sm:$0xf]
        %v414 = vld [vmem:[#allocation2 + $0xf4] sm:$0xf]
        %v415 = vld [vmem:[#allocation2 + $0xf8] sm:$0xf]
        %v416 = vld [vmem:[#allocation2 + $0xfc] sm:$0xf]
        %v417 = vld [vmem:[#allocation2 + $0x100] sm:$0xf]
        %v418 = vld [vmem:[#allocation2 + $0x104] sm:$0xf]
        %v419 = vld [vmem:[#allocation2 + $0x108] sm:$0xf]
        %v420 = vld [vmem:[#allocation2 + $0x10c] sm:$0xf]
        %v421 = vld [vmem:[#allocation2 + $0x110] sm:$0xf]
        %v422 = vld [vmem:[#allocation2 + $0x114] sm:$0xf]
        %v423 = vld [vmem:[#allocation2 + $0x118] sm:$0xf]
        %v424 = vld [vmem:[#allocation2 + $0x11c] sm:$0xf]
        %v425 = vld [vmem:[#allocation2 + $0x120] sm:$0xf]
        %v426 = vld [vmem:[#allocation2 + $0x124] sm:$0xf]
        %v427 = vld [vmem:[#allocation2 + $0x128] sm:$0xf]
        %v428 = vld [vmem:[#allocation2 + $0x12c] sm:$0xf]
        %v429 = vld [vmem:[#allocation2 + $0x130] sm:$0xf]
        %v430 = vld [vmem:[#allocation2 + $0x134] sm:$0xf]
        %v431 = vld [vmem:[#allocation2 + $0x138] sm:$0xf]
        %v432 = vld [vmem:[#allocation2 + $0x13c] sm:$0xf]
        %v513 = vunpack.c.l.b16 %v353
        %v514 = vunpack.c.l.b16 %v354
        %v515 = vunpack.c.l.b16 %v355
        %v516 = vunpack.c.l.b16 %v356
        %v517 = vunpack.c.l.b16 %v357
        %v518 = vunpack.c.l.b16 %v358
        %v519 = vunpack.c.l.b16 %v359
        %v520 = vunpack.c.l.b16 %v360
        %v521 = vunpack.c.l.b16 %v361
        %v522 = vunpack.c.l.b16 %v362
        %v523 = vunpack.c.l.b16 %v363
        %v524 = vunpack.c.l.b16 %v364
        %v525 = vunpack.c.l.b16 %v365
        %v526 = vunpack.c.l.b16 %v366
        %v527 = vunpack.c.l.b16 %v367
        %v528 = vunpack.c.l.b16 %v368
        %v529 = vunpack.c.l.b16 %v369
        %v530 = vunpack.c.l.b16 %v370
        %v531 = vunpack.c.l.b16 %v371
        %v532 = vunpack.c.l.b16 %v372
        %v533 = vunpack.c.l.b16 %v373
        %v534 = vunpack.c.l.b16 %v374
        %v535 = vunpack.c.l.b16 %v375
        %v536 = vunpack.c.l.b16 %v376
        %v537 = vunpack.c.l.b16 %v377
        %v538 = vunpack.c.l.b16 %v378
        %v539 = vunpack.c.l.b16 %v379
        %v540 = vunpack.c.l.b16 %v380
        %v541 = vunpack.c.l.b16 %v381
        %v542 = vunpack.c.l.b16 %v382
        %v543 = vunpack.c.l.b16 %v383
        %v544 = vunpack.c.l.b16 %v384
        %v545 = vunpack.c.l.b16 %v385
        %v546 = vunpack.c.l.b16 %v386
        %v547 = vunpack.c.l.b16 %v387
        %v548 = vunpack.c.l.b16 %v388
        %v549 = vunpack.c.l.b16 %v389
        %v550 = vunpack.c.l.b16 %v390
        %v551 = vunpack.c.l.b16 %v391
        %v552 = vunpack.c.l.b16 %v392
        %v553 = vunpack.c.l.b16 %v393
        %v554 = vunpack.c.l.b16 %v394
        %v555 = vunpack.c.l.b16 %v395
        %v556 = vunpack.c.l.b16 %v396
        %v557 = vunpack.c.l.b16 %v397
        %v558 = vunpack.c.l.b16 %v398
        %v559 = vunpack.c.l.b16 %v399
        %v560 = vunpack.c.l.b16 %v400
        %v561 = vunpack.c.l.b16 %v401
        %v562 = vunpack.c.l.b16 %v402
        %v563 = vunpack.c.l.b16 %v403
        %v564 = vunpack.c.l.b16 %v404
        %v565 = vunpack.c.l.b16 %v405
        %v566 = vunpack.c.l.b16 %v406
        %v567 = vunpack.c.l.b16 %v407
        %v568 = vunpack.c.l.b16 %v408
        %v569 = vunpack.c.l.b16 %v409
        %v570 = vunpack.c.l.b16 %v410
        %v571 = vunpack.c.l.b16 %v411
        %v572 = vunpack.c.l.b16 %v412
        %v573 = vunpack.c.l.b16 %v413
        %v574 = vunpack.c.l.b16 %v414
        %v575 = vunpack.c.l.b16 %v415
        %v576 = vunpack.c.l.b16 %v416
        %v577 = vunpack.c.l.b16 %v417
        %v578 = vunpack.c.l.b16 %v418
        %v579 = vunpack.c.l.b16 %v419
        %v580 = vunpack.c.l.b16 %v420
        %v581 = vunpack.c.l.b16 %v421
        %v582 = vunpack.c.l.b16 %v422
        %v583 = vunpack.c.l.b16 %v423
        %v584 = vunpack.c.l.b16 %v424
        %v585 = vunpack.c.l.b16 %v425
        %v586 = vunpack.c.l.b16 %v426
        %v587 = vunpack.c.l.b16 %v427
        %v588 = vunpack.c.l.b16 %v428
        %v589 = vunpack.c.l.b16 %v429
        %v590 = vunpack.c.l.b16 %v430
        %v591 = vunpack.c.l.b16 %v431
        %v592 = vunpack.c.l.b16 %v432
        %v593 = vpack.c.b16 %v514, %v513
        %v594 = vpack.c.b16 %v516, %v515
        %v595 = vpack.c.b16 %v518, %v517
        %v596 = vpack.c.b16 %v520, %v519
        %v597 = vpack.c.b16 %v522, %v521
        %v598 = vpack.c.b16 %v524, %v523
        %v599 = vpack.c.b16 %v526, %v525
        %v600 = vpack.c.b16 %v528, %v527
        %v601 = vpack.c.b16 %v530, %v529
        %v602 = vpack.c.b16 %v532, %v531
        %v603 = vpack.c.b16 %v534, %v533
        %v604 = vpack.c.b16 %v536, %v535
        %v605 = vpack.c.b16 %v538, %v537
        %v606 = vpack.c.b16 %v540, %v539
        %v607 = vpack.c.b16 %v542, %v541
        %v608 = vpack.c.b16 %v544, %v543
        %v609 = vpack.c.b16 %v546, %v545
        %v610 = vpack.c.b16 %v548, %v547
        %v611 = vpack.c.b16 %v550, %v549
        %v612 = vpack.c.b16 %v552, %v551
        %v613 = vpack.c.b16 %v554, %v553
        %v614 = vpack.c.b16 %v556, %v555
        %v615 = vpack.c.b16 %v558, %v557
        %v616 = vpack.c.b16 %v560, %v559
        %v617 = vpack.c.b16 %v562, %v561
        %v618 = vpack.c.b16 %v564, %v563
        %v619 = vpack.c.b16 %v566, %v565
        %v620 = vpack.c.b16 %v568, %v567
        %v621 = vpack.c.b16 %v570, %v569
        %v622 = vpack.c.b16 %v572, %v571
        %v623 = vpack.c.b16 %v574, %v573
        %v624 = vpack.c.b16 %v576, %v575
        %v625 = vpack.c.b16 %v578, %v577
        %v626 = vpack.c.b16 %v580, %v579
        %v627 = vpack.c.b16 %v582, %v581
        %v628 = vpack.c.b16 %v584, %v583
        %v629 = vpack.c.b16 %v586, %v585
        %v630 = vpack.c.b16 %v588, %v587
        %v631 = vpack.c.b16 %v590, %v589
        %v632 = vpack.c.b16 %v592, %v591
        %673 = vmatprep.subr.bf16.mxu0 0
        %674 = vmatpush1.bf16.msra.mxu0 %v593
        %675 = vmatprep.subr.bf16.mxu0 0
        %676 = vmatpush1.bf16.msra.mxu0 %v594
        %677 = vmatprep.subr.bf16.mxu0 0
        %678 = vmatpush1.bf16.msra.mxu0 %v595
        %679 = vmatprep.subr.bf16.mxu0 0
        %680 = vmatpush1.bf16.msra.mxu0 %v596
        %681 = vmatprep.subr.bf16.mxu0 0
        %682 = vmatpush1.bf16.msra.mxu0 %v597
        %683 = vmatprep.subr.bf16.mxu0 0
        %684 = vmatpush1.bf16.msra.mxu0 %v598
        %685 = vmatprep.subr.bf16.mxu0 0
        %686 = vmatpush1.bf16.msra.mxu0 %v599
        %687 = vmatprep.subr.bf16.mxu0 0
        %688 = vmatpush1.bf16.msra.mxu0 %v600
        %689 = vmatprep.subr.bf16.mxu0 0
        %690 = vmatpush1.bf16.msra.mxu0 %v601
        %691 = vmatprep.subr.bf16.mxu0 0
        %692 = vmatpush1.bf16.msra.mxu0 %v602
        %693 = vmatprep.subr.bf16.mxu0 0
        %694 = vmatpush1.bf16.msra.mxu0 %v603
        %695 = vmatprep.subr.bf16.mxu0 0
        %696 = vmatpush1.bf16.msra.mxu0 %v604
        %697 = vmatprep.subr.bf16.mxu0 0
        %698 = vmatpush1.bf16.msra.mxu0 %v605
        %699 = vmatprep.subr.bf16.mxu0 0
        %700 = vmatpush1.bf16.msra.mxu0 %v606
        %701 = vmatprep.subr.bf16.mxu0 0
        %702 = vmatpush1.bf16.msra.mxu0 %v607
        %703 = vmatprep.subr.bf16.mxu0 0
        %704 = vmatpush1.bf16.msra.mxu0 %v608
        %705 = vmatprep.mubr.bf16.mxu0 %v319
        %706 = vmatmul.mubr.bf16.gmra.mrb[0].mxu0 %v308
        %v707 = vpop.f32.mrb[0].mxu0
        %v708 = vadd.f32 0.0, %v707
        %v709 = vpop.f32.mrb[0].mxu0
        %v710 = vpop.f32.mrb[0].mxu0
        %v711 = vadd.f32 0.0, %v710
        %v712 = vpop.f32.mrb[0].mxu0
        %713 = vdwg.mxu0
        %714 = vmatprep.subr.bf16.mxu0 0
        %715 = vmatpush1.bf16.msra.mxu0 %v609
        %716 = vmatprep.subr.bf16.mxu0 0
        %717 = vmatpush1.bf16.msra.mxu0 %v610
        %718 = vmatprep.subr.bf16.mxu0 0
        %719 = vmatpush1.bf16.msra.mxu0 %v611
        %720 = vmatprep.subr.bf16.mxu0 0
        %721 = vmatpush1.bf16.msra.mxu0 %v612
        %722 = vmatprep.subr.bf16.mxu0 0
        %723 = vmatpush1.bf16.msra.mxu0 %v613
        %724 = vmatprep.subr.bf16.mxu0 0
        %725 = vmatpush1.bf16.msra.mxu0 %v614
        %726 = vmatprep.subr.bf16.mxu0 0
        %727 = vmatpush1.bf16.msra.mxu0 %v615
        %728 = vmatprep.subr.bf16.mxu0 0
        %729 = vmatpush1.bf16.msra.mxu0 %v616
        %730 = vmatprep.subr.bf16.mxu0 0
        %731 = vmatpush1.bf16.msra.mxu0 %v617
        %732 = vmatprep.subr.bf16.mxu0 0
        %733 = vmatpush1.bf16.msra.mxu0 %v618
        %734 = vmatprep.subr.bf16.mxu0 0
        %735 = vmatpush1.bf16.msra.mxu0 %v619
        %736 = vmatprep.subr.bf16.mxu0 0
        %737 = vmatpush1.bf16.msra.mxu0 %v620
        %738 = vmatprep.subr.bf16.mxu0 0
        %739 = vmatpush1.bf16.msra.mxu0 %v621
        %740 = vmatprep.subr.bf16.mxu0 0
        %741 = vmatpush1.bf16.msra.mxu0 %v622
        %742 = vmatprep.subr.bf16.mxu0 0
        %743 = vmatpush1.bf16.msra.mxu0 %v623
        %744 = vmatprep.subr.bf16.mxu0 0
        %745 = vmatpush1.bf16.msra.mxu0 %v624
        %746 = vmatprep.mubr.bf16.mxu0 %v341
        %747 = vmatmul.mubr.bf16.gmra.mrb[0].mxu0 %v330
        %v748 = vpop.f32.mrb[0].mxu0
        %v749 = vadd.f32 %v708, %v748
        %v750 = vpop.f32.mrb[0].mxu0
        %v751 = vpop.f32.mrb[0].mxu0
        %v752 = vadd.f32 %v711, %v751
        %v753 = vpop.f32.mrb[0].mxu0
        %754 = vdwg.mxu0
        %755 = vmatprep.subr.bf16.mxu0 0
        %756 = vmatpush1.bf16.msra.mxu0 %v625
        %757 = vmatprep.subr.bf16.mxu0 0
        %758 = vmatpush1.bf16.msra.mxu0 %v626
        %759 = vmatprep.subr.bf16.mxu0 0
        %760 = vmatpush1.bf16.msra.mxu0 %v627
        %761 = vmatprep.subr.bf16.mxu0 0
        %762 = vmatpush1.bf16.msra.mxu0 %v628
        %763 = vmatprep.subr.bf16.mxu0 0
        %764 = vmatpush1.bf16.msra.mxu0 %v629
        %765 = vmatprep.subr.bf16.mxu0 0
        %766 = vmatpush1.bf16.msra.mxu0 %v630
        %767 = vmatprep.subr.bf16.mxu0 0
        %768 = vmatpush1.bf16.msra.mxu0 %v631
        %769 = vmatprep.subr.bf16.mxu0 0
        %770 = vmatpush1.bf16.msra.mxu0 %v632
        %771 = vmatprep.subr.bf16.mxu0 0
        %772 = vmatpush1.bf16.msra.mxu0 0
        %773 = vmatprep.subr.bf16.mxu0 0
        %774 = vmatpush1.bf16.msra.mxu0 0
        %775 = vmatprep.subr.bf16.mxu0 0
        %776 = vmatpush1.bf16.msra.mxu0 0
        %777 = vmatprep.subr.bf16.mxu0 0
        %778 = vmatpush1.bf16.msra.mxu0 0
        %779 = vmatprep.subr.bf16.mxu0 0
        %780 = vmatpush1.bf16.msra.mxu0 0
        %781 = vmatprep.subr.bf16.mxu0 0
        %782 = vmatpush1.bf16.msra.mxu0 0
        %783 = vmatprep.subr.bf16.mxu0 0
        %784 = vmatpush1.bf16.msra.mxu0 0
        %785 = vmatprep.subr.bf16.mxu0 0
        %786 = vmatpush1.bf16.msra.mxu0 0
        %787 = vmatprep.mubr.bf16.mxu0 0
        %788 = vmatmul.mubr.bf16.gmra.mrb[0].mxu0 %v352
        %v789 = vpop.f32.mrb[0].mxu0
        %v790 = vadd.f32 %v749, %v789
        %v791 = vpop.f32.mrb[0].mxu0
        %v792 = vpop.f32.mrb[0].mxu0
        %v793 = vadd.f32 %v752, %v792
        %v794 = vpop.f32.mrb[0].mxu0
        %795 = vdwg.mxu0
        %v796 = vpack.c.bf16 %v790, %v790
        %v797 = vld [vmem:[#allocation5] sm:$0xf]
        %v798 = vld [vmem:[#allocation5 + $0x4] sm:$0xf]
        %v799 = vld [vmem:[#allocation5 + $0x8] sm:$0xf]
        %v800 = vld [vmem:[#allocation5 + $0xc] sm:$0xf]
        %v801 = vld [vmem:[#allocation5 + $0x10] sm:$0xf]
        %v802 = vld [vmem:[#allocation5 + $0x14] sm:$0xf]
        %v803 = vld [vmem:[#allocation5 + $0x18] sm:$0xf]
        %v804 = vld [vmem:[#allocation5 + $0x1c] sm:$0xf]
        %v805 = vld [vmem:[#allocation5 + $0x20] sm:$0xf]
        %v806 = vld [vmem:[#allocation5 + $0x24] sm:$0xf]
        %v807 = vld [vmem:[#allocation5 + $0x28] sm:$0xf]
        %v808 = vld [vmem:[#allocation5 + $0x2c] sm:$0xf]
        %v809 = vld [vmem:[#allocation5 + $0x30] sm:$0xf]
        %v810 = vld [vmem:[#allocation5 + $0x34] sm:$0xf]
        %v811 = vld [vmem:[#allocation5 + $0x38] sm:$0xf]
        %v812 = vld [vmem:[#allocation5 + $0x3c] sm:$0xf]
        %v813 = vpack.c.bf16 %v793, %v790
        %s814 = scalar_lea.vmem [#allocation5], 64
        %v815 = vld [vmem:[%s814] sm:$0xf]
        %v816 = vld [vmem:[%s814 + $0x4] sm:$0xf]
        %v817 = vld [vmem:[%s814 + $0x8] sm:$0xf]
        %v818 = vld [vmem:[%s814 + $0xc] sm:$0xf]
        %v819 = vld [vmem:[%s814 + $0x10] sm:$0xf]
        %v820 = vld [vmem:[%s814 + $0x14] sm:$0xf]
        %v821 = vld [vmem:[%s814 + $0x18] sm:$0xf]
        %v822 = vld [vmem:[%s814 + $0x1c] sm:$0xf]
        %v823 = vld [vmem:[%s814 + $0x20] sm:$0xf]
        %v824 = vld [vmem:[%s814 + $0x24] sm:$0xf]
        %v825 = vld [vmem:[%s814 + $0x28] sm:$0xf]
        %v826 = vld [vmem:[%s814 + $0x2c] sm:$0xf]
        %v827 = vld [vmem:[%s814 + $0x30] sm:$0xf]
        %v828 = vld [vmem:[%s814 + $0x34] sm:$0xf]
        %v829 = vld [vmem:[%s814 + $0x38] sm:$0xf]
        %v830 = vld [vmem:[%s814 + $0x3c] sm:$0xf]
        %v832 = vshrl.u32 %v813, 16
        %v834 = vshll.u32 %v813, 16
        %v836 = vrot.slane %v834, 1
        %v837 = vor.u32 %v832, %v836
        %v855 = vunpack.c.l.b16 %v815
        %v856 = vunpack.c.l.b16 %v816
        %v857 = vunpack.c.l.b16 %v817
        %v858 = vunpack.c.l.b16 %v818
        %v859 = vunpack.c.l.b16 %v819
        %v860 = vunpack.c.l.b16 %v820
        %v861 = vunpack.c.l.b16 %v821
        %v862 = vunpack.c.l.b16 %v822
        %v863 = vunpack.c.l.b16 %v823
        %v864 = vunpack.c.l.b16 %v824
        %v865 = vunpack.c.l.b16 %v825
        %v866 = vunpack.c.l.b16 %v826
        %v867 = vunpack.c.l.b16 %v827
        %v868 = vunpack.c.l.b16 %v828
        %v869 = vunpack.c.l.b16 %v829
        %v870 = vunpack.c.l.b16 %v830
        %v871 = vpack.c.b16 %v856, %v855
        %v872 = vpack.c.b16 %v858, %v857
        %v873 = vpack.c.b16 %v860, %v859
        %v874 = vpack.c.b16 %v862, %v861
        %v875 = vpack.c.b16 %v864, %v863
        %v876 = vpack.c.b16 %v866, %v865
        %v877 = vpack.c.b16 %v868, %v867
        %v878 = vpack.c.b16 %v870, %v869
        %887 = vmatprep.subr.bf16.mxu0 0
        %888 = vmatpush1.bf16.msra.mxu0 %v871
        %889 = vmatprep.subr.bf16.mxu0 0
        %890 = vmatpush1.bf16.msra.mxu0 %v872
        %891 = vmatprep.subr.bf16.mxu0 0
        %892 = vmatpush1.bf16.msra.mxu0 %v873
        %893 = vmatprep.subr.bf16.mxu0 0
        %894 = vmatpush1.bf16.msra.mxu0 %v874
        %895 = vmatprep.subr.bf16.mxu0 0
        %896 = vmatpush1.bf16.msra.mxu0 %v875
        %897 = vmatprep.subr.bf16.mxu0 0
        %898 = vmatpush1.bf16.msra.mxu0 %v876
        %899 = vmatprep.subr.bf16.mxu0 0
        %900 = vmatpush1.bf16.msra.mxu0 %v877
        %901 = vmatprep.subr.bf16.mxu0 0
        %902 = vmatpush1.bf16.msra.mxu0 %v878
        %903 = vmatprep.subr.bf16.mxu0 0
        %904 = vmatpush1.bf16.msra.mxu0 0
        %905 = vmatprep.subr.bf16.mxu0 0
        %906 = vmatpush1.bf16.msra.mxu0 0
        %907 = vmatprep.subr.bf16.mxu0 0
        %908 = vmatpush1.bf16.msra.mxu0 0
        %909 = vmatprep.subr.bf16.mxu0 0
        %910 = vmatpush1.bf16.msra.mxu0 0
        %911 = vmatprep.subr.bf16.mxu0 0
        %912 = vmatpush1.bf16.msra.mxu0 0
        %913 = vmatprep.subr.bf16.mxu0 0
        %914 = vmatpush1.bf16.msra.mxu0 0
        %915 = vmatprep.subr.bf16.mxu0 0
        %916 = vmatpush1.bf16.msra.mxu0 0
        %917 = vmatprep.subr.bf16.mxu0 0
        %918 = vmatpush1.bf16.msra.mxu0 0
        %919 = vmatprep.mubr.bf16.mxu0 0
        %920 = vmatmul.mubr.bf16.gmra.mrb[0].mxu0 %v837
        %v921 = vpop.f32.mrb[0].mxu0
        %v922 = vadd.f32 0.0, %v921
        %v923 = vpop.f32.mrb[0].mxu0
        %v924 = vpop.f32.mrb[0].mxu0
        %v925 = vpop.f32.mrb[0].mxu0
        %926 = vdwg.mxu0
        %v943 = vunpack.c.l.b16 %v797
        %v944 = vunpack.c.l.b16 %v798
        %v945 = vunpack.c.l.b16 %v799
        %v946 = vunpack.c.l.b16 %v800
        %v947 = vunpack.c.l.b16 %v801
        %v948 = vunpack.c.l.b16 %v802
        %v949 = vunpack.c.l.b16 %v803
        %v950 = vunpack.c.l.b16 %v804
        %v951 = vunpack.c.l.b16 %v805
        %v952 = vunpack.c.l.b16 %v806
        %v953 = vunpack.c.l.b16 %v807
        %v954 = vunpack.c.l.b16 %v808
        %v955 = vunpack.c.l.b16 %v809
        %v956 = vunpack.c.l.b16 %v810
        %v957 = vunpack.c.l.b16 %v811
        %v958 = vunpack.c.l.b16 %v812
        %v959 = vpack.c.b16 %v944, %v943
        %v960 = vpack.c.b16 %v946, %v945
        %v961 = vpack.c.b16 %v948, %v947
        %v962 = vpack.c.b16 %v950, %v949
        %v963 = vpack.c.b16 %v952, %v951
        %v964 = vpack.c.b16 %v954, %v953
        %v965 = vpack.c.b16 %v956, %v955
        %v966 = vpack.c.b16 %v958, %v957
        %975 = vmatprep.subr.bf16.mxu0 0
        %976 = vmatpush1.bf16.msra.mxu0 %v959
        %977 = vmatprep.subr.bf16.mxu0 0
        %978 = vmatpush1.bf16.msra.mxu0 %v960
        %979 = vmatprep.subr.bf16.mxu0 0
        %980 = vmatpush1.bf16.msra.mxu0 %v961
        %981 = vmatprep.subr.bf16.mxu0 0
        %982 = vmatpush1.bf16.msra.mxu0 %v962
        %983 = vmatprep.subr.bf16.mxu0 0
        %984 = vmatpush1.bf16.msra.mxu0 %v963
        %985 = vmatprep.subr.bf16.mxu0 0
        %986 = vmatpush1.bf16.msra.mxu0 %v964
        %987 = vmatprep.subr.bf16.mxu0 0
        %988 = vmatpush1.bf16.msra.mxu0 %v965
        %989 = vmatprep.subr.bf16.mxu0 0
        %990 = vmatpush1.bf16.msra.mxu0 %v966
        %991 = vmatprep.subr.bf16.mxu0 0
        %992 = vmatpush1.bf16.msra.mxu0 0
        %993 = vmatprep.subr.bf16.mxu0 0
        %994 = vmatpush1.bf16.msra.mxu0 0
        %995 = vmatprep.subr.bf16.mxu0 0
        %996 = vmatpush1.bf16.msra.mxu0 0
        %997 = vmatprep.subr.bf16.mxu0 0
        %998 = vmatpush1.bf16.msra.mxu0 0
        %999 = vmatprep.subr.bf16.mxu0 0
        %1000 = vmatpush1.bf16.msra.mxu0 0
        %1001 = vmatprep.subr.bf16.mxu0 0
        %1002 = vmatpush1.bf16.msra.mxu0 0
        %1003 = vmatprep.subr.bf16.mxu0 0
        %1004 = vmatpush1.bf16.msra.mxu0 0
        %1005 = vmatprep.subr.bf16.mxu0 0
        %1006 = vmatpush1.bf16.msra.mxu0 0
        %1007 = vmatprep.mubr.bf16.mxu0 0
        %1008 = vmatmul.mubr.bf16.gmra.mrb[0].mxu0 %v796
        %v1009 = vpop.f32.mrb[0].mxu0
        %v1010 = vadd.f32 %v922, %v1009
        %v1011 = vpop.f32.mrb[0].mxu0
        %v1012 = vpop.f32.mrb[0].mxu0
        %v1013 = vpop.f32.mrb[0].mxu0
        %1014 = vdwg.mxu0
        %s1015 = scalar_lea.vmem [#allocation5], 128
        %v1016 = vld [vmem:[%s1015] sm:$0xf]
        %v1017 = vld [vmem:[%s1015 + $0x4] sm:$0xf]
        %v1018 = vld [vmem:[%s1015 + $0x8] sm:$0xf]
        %v1019 = vld [vmem:[%s1015 + $0xc] sm:$0xf]
        %v1020 = vld [vmem:[%s1015 + $0x10] sm:$0xf]
        %v1021 = vld [vmem:[%s1015 + $0x14] sm:$0xf]
        %v1022 = vld [vmem:[%s1015 + $0x18] sm:$0xf]
        %v1023 = vld [vmem:[%s1015 + $0x1c] sm:$0xf]
        %v1024 = vld [vmem:[%s1015 + $0x20] sm:$0xf]
        %v1025 = vld [vmem:[%s1015 + $0x24] sm:$0xf]
        %v1026 = vld [vmem:[%s1015 + $0x28] sm:$0xf]
        %v1027 = vld [vmem:[%s1015 + $0x2c] sm:$0xf]
        %v1028 = vld [vmem:[%s1015 + $0x30] sm:$0xf]
        %v1029 = vld [vmem:[%s1015 + $0x34] sm:$0xf]
        %v1030 = vld [vmem:[%s1015 + $0x38] sm:$0xf]
        %v1031 = vld [vmem:[%s1015 + $0x3c] sm:$0xf]
        %v1033 = vrot.slane %v813, 1
        %v1051 = vunpack.c.l.b16 %v1016
        %v1052 = vunpack.c.l.b16 %v1017
        %v1053 = vunpack.c.l.b16 %v1018
        %v1054 = vunpack.c.l.b16 %v1019
        %v1055 = vunpack.c.l.b16 %v1020
        %v1056 = vunpack.c.l.b16 %v1021
        %v1057 = vunpack.c.l.b16 %v1022
        %v1058 = vunpack.c.l.b16 %v1023
        %v1059 = vunpack.c.l.b16 %v1024
        %v1060 = vunpack.c.l.b16 %v1025
        %v1061 = vunpack.c.l.b16 %v1026
        %v1062 = vunpack.c.l.b16 %v1027
        %v1063 = vunpack.c.l.b16 %v1028
        %v1064 = vunpack.c.l.b16 %v1029
        %v1065 = vunpack.c.l.b16 %v1030
        %v1066 = vunpack.c.l.b16 %v1031
        %v1067 = vpack.c.b16 %v1052, %v1051
        %v1068 = vpack.c.b16 %v1054, %v1053
        %v1069 = vpack.c.b16 %v1056, %v1055
        %v1070 = vpack.c.b16 %v1058, %v1057
        %v1071 = vpack.c.b16 %v1060, %v1059
        %v1072 = vpack.c.b16 %v1062, %v1061
        %v1073 = vpack.c.b16 %v1064, %v1063
        %v1074 = vpack.c.b16 %v1066, %v1065
        %1083 = vmatprep.subr.bf16.mxu0 0
        %1084 = vmatpush1.bf16.msra.mxu0 %v1067
        %1085 = vmatprep.subr.bf16.mxu0 0
        %1086 = vmatpush1.bf16.msra.mxu0 %v1068
        %1087 = vmatprep.subr.bf16.mxu0 0
        %1088 = vmatpush1.bf16.msra.mxu0 %v1069
        %1089 = vmatprep.subr.bf16.mxu0 0
        %1090 = vmatpush1.bf16.msra.mxu0 %v1070
        %1091 = vmatprep.subr.bf16.mxu0 0
        %1092 = vmatpush1.bf16.msra.mxu0 %v1071
        %1093 = vmatprep.subr.bf16.mxu0 0
        %1094 = vmatpush1.bf16.msra.mxu0 %v1072
        %1095 = vmatprep.subr.bf16.mxu0 0
        %1096 = vmatpush1.bf16.msra.mxu0 %v1073
        %1097 = vmatprep.subr.bf16.mxu0 0
        %1098 = vmatpush1.bf16.msra.mxu0 %v1074
        %1099 = vmatprep.subr.bf16.mxu0 0
        %1100 = vmatpush1.bf16.msra.mxu0 0
        %1101 = vmatprep.subr.bf16.mxu0 0
        %1102 = vmatpush1.bf16.msra.mxu0 0
        %1103 = vmatprep.subr.bf16.mxu0 0
        %1104 = vmatpush1.bf16.msra.mxu0 0
        %1105 = vmatprep.subr.bf16.mxu0 0
        %1106 = vmatpush1.bf16.msra.mxu0 0
        %1107 = vmatprep.subr.bf16.mxu0 0
        %1108 = vmatpush1.bf16.msra.mxu0 0
        %1109 = vmatprep.subr.bf16.mxu0 0
        %1110 = vmatpush1.bf16.msra.mxu0 0
        %1111 = vmatprep.subr.bf16.mxu0 0
        %1112 = vmatpush1.bf16.msra.mxu0 0
        %1113 = vmatprep.subr.bf16.mxu0 0
        %1114 = vmatpush1.bf16.msra.mxu0 0
        %1115 = vmatprep.mubr.bf16.mxu0 0
        %1116 = vmatmul.mubr.bf16.gmra.mrb[0].mxu0 %v1033
        %v1117 = vpop.f32.mrb[0].mxu0
        %v1118 = vadd.f32 0.0, %v1117
        %v1119 = vpop.f32.mrb[0].mxu0
        %v1120 = vpop.f32.mrb[0].mxu0
        %v1121 = vpop.f32.mrb[0].mxu0
        %1122 = vdwg.mxu0
        %v1123 = vadd.f32 %v1010, %v1118
        %v1124 = vld [vmem:[%s3] sm:$0x1]
        %v1126 = vlaneseq
        %v1127 = vshrl.u32 %v1126, 7
        %v1128 = vsub.s32 0, %v1127
        %v1129 = vrot.slane %v1124, %v1128
        %v1131 = vadd.f32 %v1123, %v1129
        %v1132 = vlaneseq
        %v1133 = vshrl.u32 %v1132, 7
        %vm1134 = vcmp.ge.s32.totalorder %v297, 0
        %vm1135 = vcmp.lt.s32.totalorder %v297, 8
        %vm1136 = vmand %vm1134, %vm1135
        %vm1137 = vcmp.le.s32.totalorder %v1133, 6
        %vm1138 = vmand %vm1136, %vm1137
        %vm1139 = vcmp.ge.s32.totalorder %v297, 8
        %vm1140 = vcmp.lt.s32.totalorder %v297, 16
        %vm1141 = vmand %vm1139, %vm1140
        %vm1142 = vcmp.le.s32.totalorder %v1133, 5
        %vm1143 = vmand %vm1141, %vm1142
        %vm1144 = vmor %vm1138, %vm1143
        %v1145 = vmax.f32 %v1131, 0.0
        %v1146 = vsel %vm1144, %v1145, 0.0
        %v1147 = vrot.slane %v1146, 4
        %v1148 = vmax.f32 %v1146, %v1147
        %v1149 = vrot.slane %v1148, 2
        %v1150 = vmax.f32 %v1148, %v1149
        %v1151 = vrot.slane %v1150, 1
        %v1152 = vmax.f32 %v1150, %v1151
        %v1153 = vpack.c.bf16 %v1152, %v1152
        %v1154 = vld [vmem:[#allocation7] sm:$0xf]
        %v1155 = vld [vmem:[#allocation7 + $0x4] sm:$0xf]
        %v1156 = vld [vmem:[#allocation7 + $0x8] sm:$0xf]
        %v1157 = vld [vmem:[#allocation7 + $0xc] sm:$0xf]
        %v1158 = vld [vmem:[#allocation7 + $0x10] sm:$0xf]
        %v1159 = vld [vmem:[#allocation7 + $0x14] sm:$0xf]
        %v1160 = vld [vmem:[#allocation7 + $0x18] sm:$0xf]
        %v1161 = vld [vmem:[#allocation7 + $0x1c] sm:$0xf]
        %v1162 = vld [vmem:[#allocation7 + $0x20] sm:$0xf]
        %v1163 = vld [vmem:[#allocation7 + $0x24] sm:$0xf]
        %v1164 = vld [vmem:[#allocation7 + $0x28] sm:$0xf]
        %v1165 = vld [vmem:[#allocation7 + $0x2c] sm:$0xf]
        %v1166 = vld [vmem:[#allocation7 + $0x30] sm:$0xf]
        %v1167 = vld [vmem:[#allocation7 + $0x34] sm:$0xf]
        %v1168 = vld [vmem:[#allocation7 + $0x38] sm:$0xf]
        %v1169 = vld [vmem:[#allocation7 + $0x3c] sm:$0xf]
        %v1170 = vld [vmem:[%s5] sm:$0x1]
        %v1187 = vunpack.c.l.b16 %v1154
        %v1188 = vunpack.c.l.b16 %v1155
        %v1189 = vunpack.c.l.b16 %v1156
        %v1190 = vunpack.c.l.b16 %v1157
        %v1191 = vunpack.c.l.b16 %v1158
        %v1192 = vunpack.c.l.b16 %v1159
        %v1193 = vunpack.c.l.b16 %v1160
        %v1194 = vunpack.c.l.b16 %v1161
        %v1195 = vunpack.c.l.b16 %v1162
        %v1196 = vunpack.c.l.b16 %v1163
        %v1197 = vunpack.c.l.b16 %v1164
        %v1198 = vunpack.c.l.b16 %v1165
        %v1199 = vunpack.c.l.b16 %v1166
        %v1200 = vunpack.c.l.b16 %v1167
        %v1201 = vunpack.c.l.b16 %v1168
        %v1202 = vunpack.c.l.b16 %v1169
        %v1203 = vpack.c.b16 %v1188, %v1187
        %v1204 = vpack.c.b16 %v1190, %v1189
        %v1205 = vpack.c.b16 %v1192, %v1191
        %v1206 = vpack.c.b16 %v1194, %v1193
        %v1207 = vpack.c.b16 %v1196, %v1195
        %v1208 = vpack.c.b16 %v1198, %v1197
        %v1209 = vpack.c.b16 %v1200, %v1199
        %v1210 = vpack.c.b16 %v1202, %v1201
        %1219 = vmatprep.subr.bf16.mxu0 0
        %1220 = vmatpush1.bf16.msra.mxu0 %v1203
        %1221 = vmatprep.subr.bf16.mxu0 0
        %1222 = vmatpush1.bf16.msra.mxu0 %v1204
        %1223 = vmatprep.subr.bf16.mxu0 0
        %1224 = vmatpush1.bf16.msra.mxu0 %v1205
        %1225 = vmatprep.subr.bf16.mxu0 0
        %1226 = vmatpush1.bf16.msra.mxu0 %v1206
        %1227 = vmatprep.subr.bf16.mxu0 0
        %1228 = vmatpush1.bf16.msra.mxu0 %v1207
        %1229 = vmatprep.subr.bf16.mxu0 0
        %1230 = vmatpush1.bf16.msra.mxu0 %v1208
        %1231 = vmatprep.subr.bf16.mxu0 0
        %1232 = vmatpush1.bf16.msra.mxu0 %v1209
        %1233 = vmatprep.subr.bf16.mxu0 0
        %1234 = vmatpush1.bf16.msra.mxu0 %v1210
        %1235 = vmatprep.subr.bf16.mxu0 0
        %1236 = vmatpush1.bf16.msra.mxu0 0
        %1237 = vmatprep.subr.bf16.mxu0 0
        %1238 = vmatpush1.bf16.msra.mxu0 0
        %1239 = vmatprep.subr.bf16.mxu0 0
        %1240 = vmatpush1.bf16.msra.mxu0 0
        %1241 = vmatprep.subr.bf16.mxu0 0
        %1242 = vmatpush1.bf16.msra.mxu0 0
        %1243 = vmatprep.subr.bf16.mxu0 0
        %1244 = vmatpush1.bf16.msra.mxu0 0
        %1245 = vmatprep.subr.bf16.mxu0 0
        %1246 = vmatpush1.bf16.msra.mxu0 0
        %1247 = vmatprep.subr.bf16.mxu0 0
        %1248 = vmatpush1.bf16.msra.mxu0 0
        %1249 = vmatprep.subr.bf16.mxu0 0
        %1250 = vmatpush1.bf16.msra.mxu0 0
        %1251 = vmatprep.mubr.bf16.mxu0 0
        %1252 = vmatmul.mubr.bf16.gmra.mrb[0].mxu0 %v1153
        %v1253 = vpop.f32.mrb[0].mxu0
        %v1254 = vadd.f32 %v1170, %v1253
        %v1255 = vpop.f32.mrb[0].mxu0
        %v1256 = vpop.f32.mrb[0].mxu0
        %v1257 = vpop.f32.mrb[0].mxu0
        %1258 = vdwg.mxu0
        %1259 = vst [vmem:[%s287] sm:$0x1] %v1254
        %s1260 = sand.u32 %s161, 1
        %s1261 = scalar_lea.sflag [#allocation4], %s1260
        %s1262 = sand.u32 %s161, 1
        %s1263 = scalar_lea.vmem [#allocation8], %s1262
        // Predicated region
        $region57: #{tpu_custom_call.1} parent=43 // pred_check
          %p1264 = pneg %p171
        $region58: #{tpu_custom_call.1} parent=43 // pred_check_branch
          %1266 = sbr.rel (%p1264) target = $region60
        $region59: #{tpu_custom_call.1} parent=43 // pred_region
          %s1268 = ssub.s32 16, 16
          %1269 = vsyncadd %s1261, %s1268
          %s1270 = smul.addr %s22, 16
          %s1271 = scalar_lea.hbm %s6, %s1270
          %s1273 = sshll.u32 %s1263, 4
          %s1274 = int_to_ptr.vmem [resolvable:$true] %s1273
          %1276 = dma.vmem_to_hbm [thread:$0]  %s1274, 16, %s1271, %s1261
        $region60: #{tpu_custom_call.1} parent=43 // pred_fallthru
          _
      $region44: #{tpu_custom_call.1} parent=5 // pred_fallthru
        _
      %p1277 = scmp.le.s32.totalorder 2, %s17
      // Predicated region
      $region61: #{tpu_custom_call.1} parent=5 // pred_check
        %p1278 = pneg %p1277
      $region62: #{tpu_custom_call.1} parent=5 // pred_check_branch
        %1280 = sbr.rel (%p1278) target = $region64
      $region63: #{tpu_custom_call.1} parent=5 // pred_region
        %s1281 = ssub.s32 %s17, 2
        // Predicated region
        $region65: #{tpu_custom_call.1} parent=63 // pred_check
          %p1282 = pneg %p177
        $region66: #{tpu_custom_call.1} parent=63 // pred_check_branch
          %1284 = sbr.rel (%p1282) target = $region68
        $region67: #{tpu_custom_call.1} parent=63 // pred_region
          %s1285 = sand.u32 %s162, 1
          %s1286 = scalar_lea.sflag [#allocation4], %s1285
          %s1287 = sand.u32 %s162, 1
          %s1288 = scalar_lea.vmem [#allocation8], %s1287
          %1289 = dma.done %s1286, 16
        $region68: #{tpu_custom_call.1} parent=63 // pred_fallthru
          _
      $region64: #{tpu_custom_call.1} parent=5 // pred_fallthru
        _
    $region6: #{tpu_custom_call.1} parent=1 // loop_footer
      %s21 = sadd.s32 1, %s17
    $region7: #{tpu_custom_call.1} parent=1 // loop_footer_branch
      %16 = sbr.rel target = $region3
    $region8: #{tpu_custom_call.1} parent=1 // loop_exit
      _
    %1290 = vsyncpa [#allocation3], 1
    %s1291 = scalar_lea.sflag [#allocation3], 1
    %1292 = vsyncpa %s1291, 1
    %1293 = vsyncpa [#allocation6], 1
    %1294 = vsyncpa [#allocation4], 1
    %s1295 = scalar_lea.sflag [#allocation4], 1
    %1296 = vsyncpa %s1295, 1

</llo_original>
